<compile_context>
chip_gen: v7x
topology: tpu7x:2x2x1
jax: 0.10.0
libtpu: 0.0.40
codegen_flags: <defaults>
</compile_context>

<pallas_src>
import functools

import jax
import jax.numpy as jnp
from jax import lax
from jax.experimental import pallas as pl
from jax.experimental.pallas import tpu as pltpu

HIDDEN = 64          # per-network hidden width (PyTorch spec)
FUSED = 2 * HIDDEN   # 128: actor hidden | critic hidden, lane-concatenated
OUT_LANES = 128      # lane-dense combined output width


# ----------------------------------------------------------------------------
# Pallas kernel: fused actor+critic MLP for one batch tile.
#   x_ref   : (tile, state_dim)
#   w1_ref  : (state_dim, 128)   [aw1 | cw1]
#   w23_ref : (256, 128)         rows 0:128 = blockdiag(aw2, cw2)
#                                rows 128:256 = blockdiag-ish layer 3
#                                  (aw3 -> cols 0:action_dim,
#                                   cw3 -> col action_dim, rest zero)
#   b_ref   : (8, 128)           row 0 = [ab1|cb1], row 1 = [ab2|cb2],
#                                row 2 = [ab3, cb3, 0...]
#   out_ref : (tile, 128)        lanes [0:A) = log-probs, lane A = value
# ----------------------------------------------------------------------------
def _actor_critic_kernel(x_ref, w1_ref, w23_ref, b_ref, out_ref, *,
                         action_dim):
    x = x_ref[...]

    b1 = b_ref[0:1, :]
    b2 = b_ref[1:2, :]
    b3 = b_ref[2:3, :]

    # Layer 1: (tile, state_dim) @ (state_dim, 128)  -> both networks at once.
    h = jnp.tanh(jnp.dot(x, w1_ref[...],
                         preferred_element_type=jnp.float32) + b1)
    # Layer 2: block-diagonal (128, 128).
    h = jnp.tanh(jnp.dot(h, w23_ref[0:FUSED, :],
                         preferred_element_type=jnp.float32) + b2)
    # Layer 3: actor logits in lanes [0:A), critic value in lane A.
    z3 = jnp.dot(h, w23_ref[FUSED:2 * FUSED, :],
                 preferred_element_type=jnp.float32) + b3

    # Log-softmax restricted to the actor lanes (mask out value/padding lanes).
    lane = lax.broadcasted_iota(jnp.int32, (1, OUT_LANES), 1)
    actor_mask = lane < action_dim
    neg_big = jnp.float32(-1e30)
    logits = jnp.where(actor_mask, z3, neg_big)
    m = jnp.max(logits, axis=-1, keepdims=True)
    e = jnp.exp(logits - m)
    lse = m + jnp.log(jnp.sum(e, axis=-1, keepdims=True))
    logp = logits - lse

    # Combined lane-dense store: log-probs where actor, raw z3 elsewhere
    # (lane `action_dim` of z3 is exactly the critic value).
    out_ref[...] = jnp.where(actor_mask, logp, z3)


# ----------------------------------------------------------------------------
# pallas_call wrapper.
# ----------------------------------------------------------------------------
@functools.partial(jax.jit, static_argnames=("action_dim", "batch_tile"))
def _fused_forward(state, w1, w23, bias, *, action_dim, batch_tile):
    B, state_dim = state.shape
    assert B % batch_tile == 0, "batch must be divisible by batch_tile"
    grid = (B // batch_tile,)

    flops = 2 * B * (state_dim * FUSED + FUSED * FUSED + FUSED * FUSED)
    transc = B * (2 * FUSED + OUT_LANES + 8)          # tanh x2, exp, log
    nbytes = 4 * (B * state_dim + state_dim * FUSED
                  + 2 * FUSED * FUSED + 8 * OUT_LANES + B * OUT_LANES)

    kernel = functools.partial(_actor_critic_kernel, action_dim=action_dim)

    out = pl.pallas_call(
        kernel,
        out_shape=jax.ShapeDtypeStruct((B, OUT_LANES), jnp.float32),
        grid_spec=pltpu.PrefetchScalarGridSpec(
            num_scalar_prefetch=0,
            grid=grid,
            in_specs=[
                pl.BlockSpec((batch_tile, state_dim), lambda i: (i, 0)),
                pl.BlockSpec((state_dim, FUSED), lambda i: (0, 0)),
                pl.BlockSpec((2 * FUSED, FUSED), lambda i: (0, 0)),
                pl.BlockSpec((8, OUT_LANES), lambda i: (0, 0)),
            ],
            out_specs=pl.BlockSpec((batch_tile, OUT_LANES), lambda i: (i, 0)),
        ),
        compiler_params=pltpu.CompilerParams(
            dimension_semantics=("parallel",)),
        cost_estimate=pl.CostEstimate(
            flops=flops, transcendentals=transc, bytes_accessed=nbytes),
    )(state, w1, w23, bias)
    return out


def _pick_batch_tile(B):
    # biggest tile that covers the batch (grid=1 for small B), capped at 256
    # rows so x/out tiles stay comfortably inside scoped VMEM on every chip.
    for cand in (256, 128, 64, 32, 16, 8):
        if B % cand == 0 and cand <= B:
            return cand
    return B


def actor_critic_forward(state, params, *, batch_tile=None):
    """Returns (action_probs (B, A), state_values (B, 1)) — PyTorch semantics."""
    logp, values = actor_critic_logprobs(state, params, batch_tile=batch_tile)
    return jnp.exp(logp), values


def actor_critic_logprobs(state, params, *, batch_tile=None):
    """Returns (log_probs (B, A), state_values (B, 1))."""
    B = state.shape[0]
    action_dim = int(params["action_dim"])
    if batch_tile is None:
        batch_tile = _pick_batch_tile(B)
    out = _fused_forward(state, params["w1"], params["w23"], params["bias"],
                         action_dim=action_dim, batch_tile=batch_tile)
    logp = out[:, :action_dim]
    values = out[:, action_dim:action_dim + 1]
    return logp, values


# ----------------------------------------------------------------------------
# Categorical distribution glue (log_prob / entropy / sample) in plain JAX,
# driven by the kernel's log-probs (numerically safe: no log(0)).
# ----------------------------------------------------------------------------
def categorical_log_prob(logp, action):
    return jnp.take_along_axis(logp, action[:, None], axis=-1)[:, 0]


def categorical_entropy(logp):
    return -jnp.sum(jnp.exp(logp) * logp, axis=-1)


def evaluate(state, action, params):
    """Mirrors ActorCritic.evaluate(state, action)."""
    logp, values = actor_critic_logprobs(state, params)
    return categorical_log_prob(logp, action), values, categorical_entropy(logp)


def act(state, params, key):
    """Mirrors ActorCritic.act(state) (sampling done in plain JAX)."""
    logp, values = actor_critic_logprobs(state, params)
    action = jax.random.categorical(key, logp, axis=-1)
    return action, categorical_log_prob(logp, action), values


# ----------------------------------------------------------------------------
# Parameter init (PyTorch nn.Linear-style uniform bounds) + lane-wise packing.
# ----------------------------------------------------------------------------
def init_params(key, state_dim, action_dim):
    def linear(k, fan_in, fan_out):
        kw, kb = jax.random.split(k)
        bound = 1.0 / jnp.sqrt(fan_in)
        w = jax.random.uniform(kw, (fan_in, fan_out), jnp.float32, -bound, bound)
        b = jax.random.uniform(kb, (fan_out,), jnp.float32, -bound, bound)
        return w, b

    ks = jax.random.split(key, 6)
    aw1, ab1 = linear(ks[0], state_dim, HIDDEN)
    aw2, ab2 = linear(ks[1], HIDDEN, HIDDEN)
    aw3, ab3 = linear(ks[2], HIDDEN, action_dim)
    cw1, cb1 = linear(ks[3], state_dim, HIDDEN)
    cw2, cb2 = linear(ks[4], HIDDEN, HIDDEN)
    cw3, cb3 = linear(ks[5], HIDDEN, 1)
    raw = dict(aw1=aw1, ab1=ab1, aw2=aw2, ab2=ab2, aw3=aw3, ab3=ab3,
               cw1=cw1, cb1=cb1, cw2=cw2, cb2=cb2, cw3=cw3, cb3=cb3)
    return pack_params(raw, state_dim, action_dim), raw


def pack_params(p, state_dim, action_dim):
    """Pack 12 small tensors into 3 lane-dense slabs for the fused kernel."""
    # Layer 1: [aw1 | cw1]  -> (state_dim, 128)
    w1 = jnp.concatenate([p["aw1"], p["cw1"]], axis=1)

    # Layer 2: block-diag(aw2, cw2) -> (128, 128); layer 3 packed below it.
    w23 = jnp.zeros((2 * FUSED, FUSED), jnp.float32)
    w23 = w23.at[0:HIDDEN, 0:HIDDEN].set(p["aw2"])
    w23 = w23.at[HIDDEN:FUSED, HIDDEN:FUSED].set(p["cw2"])
    # Layer 3: aw3 -> cols [0:A), cw3 -> col A, rest zero.
    w23 = w23.at[FUSED:FUSED + HIDDEN, 0:action_dim].set(p["aw3"])
    w23 = w23.at[FUSED + HIDDEN:2 * FUSED, action_dim:action_dim + 1].set(p["cw3"])

    # Biases: rows 0/1/2 of an (8, 128) slab (padding lanes stay exactly 0 so
    # they cannot leak into logits; logit padding lanes are masked anyway).
    bias = jnp.zeros((8, OUT_LANES), jnp.float32)
    bias = bias.at[0, 0:HIDDEN].set(p["ab1"]).at[0, HIDDEN:FUSED].set(p["cb1"])
    bias = bias.at[1, 0:HIDDEN].set(p["ab2"]).at[1, HIDDEN:FUSED].set(p["cb2"])
    bias = bias.at[2, 0:action_dim].set(p["ab3"])
    bias = bias.at[2, action_dim].set(p["cb3"][0])

    return dict(w1=w1, w23=w23, bias=bias, action_dim=action_dim)


if __name__ == "__main__":
    state_dim, action_dim, batch = 16, 4, 16

    root = jax.random.PRNGKey(0)
    k_params, k_state, k_action, k_sample = jax.random.split(root, 4)

    params, raw = init_params(k_params, state_dim, action_dim)
    state = jax.random.normal(k_state, (batch, state_dim), jnp.float32)
    action = jax.random.randint(k_action, (batch,), 0, action_dim)

    # evaluate() path (Pallas kernel for fused actor+critic MLPs)
    logp, values, entropy = evaluate(state, action, params)
    jax.block_until_ready((logp, values, entropy))

    # act() path (same kernel; sampling is glue)
    a, a_logp, v = act(state, params, k_sample)
    jax.block_until_ready((a, a_logp, v))

    # sanity check against a pure-JAX reference built from the raw params
    def ref_forward(x, p):
        h = jnp.tanh(x @ p["aw1"] + p["ab1"])
        h = jnp.tanh(h @ p["aw2"] + p["ab2"])
        probs = jax.nn.softmax(h @ p["aw3"] + p["ab3"], axis=-1)
        c = jnp.tanh(x @ p["cw1"] + p["cb1"])
        c = jnp.tanh(c @ p["cw2"] + p["cb2"])
        return probs, (c @ p["cw3"] + p["cb3"])

    probs_k, values_k = actor_critic_forward(state, params)
    probs_r, values_r = ref_forward(state, raw)
    assert probs_k.shape == (batch, action_dim)
    assert values_k.shape == (batch, 1)
    assert jnp.allclose(probs_k, probs_r, atol=1e-5, rtol=1e-5)
    assert jnp.allclose(values_k, values_r, atol=1e-5, rtol=1e-5)

    # distribution glue consistency
    logp_r = jnp.log(probs_r)
    assert jnp.allclose(logp, jnp.take_along_axis(logp_r, action[:, None],
                                                  axis=-1)[:, 0],
                        atol=1e-5, rtol=1e-5)
    assert jnp.allclose(entropy, -jnp.sum(probs_r * logp_r, axis=-1),
                        atol=1e-5, rtol=1e-5)
    assert jnp.all(jnp.isfinite(logp)) and jnp.all(jnp.isfinite(entropy))

    print("KERNEL_OK")
</pallas_src>

<mosaic_0001>
module attributes {stable_mosaic.version = 11 : i64} {
  func.func @_actor_critic_kernel(%arg0: i32, %arg1: memref<16x16xf32, #tpu.memory_space<vmem>>, %arg2: memref<16x128xf32, #tpu.memory_space<vmem>>, %arg3: memref<256x128xf32, #tpu.memory_space<vmem>>, %arg4: memref<8x128xf32, #tpu.memory_space<vmem>>, %arg5: memref<16x128xf32, #tpu.memory_space<vmem>>) attributes {dimension_semantics = [#tpu.dimension_semantics<parallel>], iteration_bounds = array<i64: 1>, scalar_prefetch = 0 : i64, scratch_operands = 0 : i64, tpu.core_type = #tpu.core_type<tc>, window_params = [{transform_indices = @transform_0, window_bounds = array<i64: 16, 16>}, {pipeline_mode = #tpu.pipeline_mode<synchronous>, transform_indices = @transform_1, window_bounds = array<i64: 16, 128>}, {pipeline_mode = #tpu.pipeline_mode<synchronous>, transform_indices = @transform_2, window_bounds = array<i64: 256, 128>}, {pipeline_mode = #tpu.pipeline_mode<synchronous>, transform_indices = @transform_3, window_bounds = array<i64: 8, 128>}, {transform_indices = @transform_4, window_bounds = array<i64: 16, 128>}]} {
    %c0 = arith.constant 0 : index
    %c0_0 = arith.constant 0 : index
    %0 = vector.load %arg1[%c0, %c0_0] : memref<16x16xf32, #tpu.memory_space<vmem>>, vector<16x16xf32>
    %c0_1 = arith.constant 0 : index
    %c0_2 = arith.constant 0 : index
    %1 = vector.load %arg4[%c0_1, %c0_2] : memref<8x128xf32, #tpu.memory_space<vmem>>, vector<1x128xf32>
    %c1 = arith.constant 1 : index
    %c0_3 = arith.constant 0 : index
    %2 = vector.load %arg4[%c1, %c0_3] : memref<8x128xf32, #tpu.memory_space<vmem>>, vector<1x128xf32>
    %c2 = arith.constant 2 : index
    %c0_4 = arith.constant 0 : index
    %3 = vector.load %arg4[%c2, %c0_4] : memref<8x128xf32, #tpu.memory_space<vmem>>, vector<1x128xf32>
    %c0_5 = arith.constant 0 : index
    %c0_6 = arith.constant 0 : index
    %4 = vector.load %arg2[%c0_5, %c0_6] : memref<16x128xf32, #tpu.memory_space<vmem>>, vector<16x128xf32>
    %cst = arith.constant dense<0.000000e+00> : vector<16x128xf32>
    %5 = tpu.matmul %0, %4, %cst {dimension_numbers = #tpu.dot_dimension_numbers<[1], [0], [0], [1], [0, 0, 1, 1], [], []>} : vector<16x16xf32>, vector<16x128xf32>, vector<16x128xf32> -> vector<16x128xf32>
    %6 = vector.broadcast %1 : vector<1x128xf32> to vector<16x128xf32>
    %7 = arith.addf %5, %6 : vector<16x128xf32>
    %8 = math.tanh %7 : vector<16x128xf32>
    %c0_7 = arith.constant 0 : index
    %c0_8 = arith.constant 0 : index
    %9 = vector.load %arg3[%c0_7, %c0_8] : memref<256x128xf32, #tpu.memory_space<vmem>>, vector<128x128xf32>
    %cst_9 = arith.constant dense<0.000000e+00> : vector<16x128xf32>
    %10 = tpu.matmul %8, %9, %cst_9 {dimension_numbers = #tpu.dot_dimension_numbers<[1], [0], [0], [1], [0, 0, 1, 1], [], []>} : vector<16x128xf32>, vector<128x128xf32>, vector<16x128xf32> -> vector<16x128xf32>
    %11 = vector.broadcast %2 : vector<1x128xf32> to vector<16x128xf32>
    %12 = arith.addf %10, %11 : vector<16x128xf32>
    %13 = math.tanh %12 : vector<16x128xf32>
    %c128 = arith.constant 128 : index
    %c0_10 = arith.constant 0 : index
    %14 = vector.load %arg3[%c128, %c0_10] : memref<256x128xf32, #tpu.memory_space<vmem>>, vector<128x128xf32>
    %cst_11 = arith.constant dense<0.000000e+00> : vector<16x128xf32>
    %15 = tpu.matmul %13, %14, %cst_11 {dimension_numbers = #tpu.dot_dimension_numbers<[1], [0], [0], [1], [0, 0, 1, 1], [], []>} : vector<16x128xf32>, vector<128x128xf32>, vector<16x128xf32> -> vector<16x128xf32>
    %16 = vector.broadcast %3 : vector<1x128xf32> to vector<16x128xf32>
    %17 = arith.addf %15, %16 : vector<16x128xf32>
    %18 = tpu.iota {dimensions = array<i32: 1>} : vector<1x128xi32>
    %c4_i32 = arith.constant 4 : i32
    %19 = vector.broadcast %c4_i32 : i32 to vector<1x128xi32>
    %20 = arith.cmpi slt, %18, %19 : vector<1x128xi32>
    %cst_12 = arith.constant -1.000000e+30 : f32
    %21 = vector.shape_cast %20 : vector<1x128xi1> to vector<1x128xi1>
    %22 = vector.broadcast %21 : vector<1x128xi1> to vector<16x128xi1>
    %23 = vector.broadcast %cst_12 : f32 to vector<16x128xf32>
    %24 = arith.select %22, %17, %23 : vector<16x128xi1>, vector<16x128xf32>
    %cst_13 = arith.constant dense<0xFF800000> : vector<16xf32>
    %25 = vector.multi_reduction <maximumf>, %24, %cst_13 [1] : vector<16x128xf32> to vector<16xf32>
    %26 = vector.shape_cast %25 : vector<16xf32> to vector<16x1xf32>
    %27 = vector.broadcast %26 : vector<16x1xf32> to vector<16x128xf32>
    %28 = arith.subf %24, %27 : vector<16x128xf32>
    %29 = math.exp %28 : vector<16x128xf32>
    %cst_14 = arith.constant dense<0.000000e+00> : vector<16xf32>
    %30 = vector.multi_reduction <add>, %29, %cst_14 [1] : vector<16x128xf32> to vector<16xf32>
    %31 = vector.shape_cast %30 : vector<16xf32> to vector<16x1xf32>
    %32 = math.log %31 : vector<16x1xf32>
    %33 = arith.addf %26, %32 : vector<16x1xf32>
    %34 = vector.broadcast %33 : vector<16x1xf32> to vector<16x128xf32>
    %35 = arith.subf %24, %34 : vector<16x128xf32>
    %36 = vector.shape_cast %20 : vector<1x128xi1> to vector<1x128xi1>
    %37 = vector.broadcast %36 : vector<1x128xi1> to vector<16x128xi1>
    %38 = arith.select %37, %35, %17 : vector<16x128xi1>, vector<16x128xf32>
    %c0_15 = arith.constant 0 : index
    %c0_16 = arith.constant 0 : index
    %39 = vector.load %arg5[%c0_15, %c0_16] : memref<16x128xf32, #tpu.memory_space<vmem>>, vector<16x128xf32>
    tpu.vector_store %arg5[%c0_15, %c0_16], %38 {strides = array<i32>} : memref<16x128xf32, #tpu.memory_space<vmem>>, vector<16x128xf32>,
    return
  }
  func.func @transform_0(%arg0: i32) -> (i32, i32) {
    %c0_i32 = arith.constant 0 : i32
    %c0_i32_0 = arith.constant 0 : i32
    return %arg0, %c0_i32 : i32, i32
  }
  func.func @transform_1(%arg0: i32) -> (i32, i32) {
    %c0_i32 = arith.constant 0 : i32
    %c0_i32_0 = arith.constant 0 : i32
    %c0_i32_1 = arith.constant 0 : i32
    return %c0_i32, %c0_i32_0 : i32, i32
  }
  func.func @transform_2(%arg0: i32) -> (i32, i32) {
    %c0_i32 = arith.constant 0 : i32
    %c0_i32_0 = arith.constant 0 : i32
    %c0_i32_1 = arith.constant 0 : i32
    return %c0_i32, %c0_i32_0 : i32, i32
  }
  func.func @transform_3(%arg0: i32) -> (i32, i32) {
    %c0_i32 = arith.constant 0 : i32
    %c0_i32_0 = arith.constant 0 : i32
    %c0_i32_1 = arith.constant 0 : i32
    return %c0_i32, %c0_i32_0 : i32, i32
  }
  func.func @transform_4(%arg0: i32) -> (i32, i32) {
    %c0_i32 = arith.constant 0 : i32
    %c0_i32_0 = arith.constant 0 : i32
    return %arg0, %c0_i32 : i32, i32
  }
}

</mosaic_0001>

<llo_original>
// kernel: _fused_forward.1
$region0: #{_fused_forward.1}
  #allocation0 [shape = 'u32[]', space=smem, size = 0x4, offset = 0x4, fixed_abs, tag = 'smem constant byte address 0x4 - core index']
  #allocation1 [shape = 'u32[144,128]{1,0:T(1,128)}', space=vmem, size = 0x12000, scoped, tag = 'internal scratch']
  %s0 = inlined_call_operand.hbm [shape: f32[16,16], index: 0, kind: input, shape index: {}]
  %s1 = inlined_call_operand.hbm [shape: f32[16,128], index: 1, kind: input, shape index: {}]
  %s2 = inlined_call_operand.hbm [shape: f32[256,128], index: 2, kind: input, shape index: {}]
  %s3 = inlined_call_operand.vmem [shape: f32[8,128], index: 3, kind: input, shape index: {}]
  %s4 = inlined_call_operand.hbm [shape: f32[16,128], index: 4, kind: output, shape index: {}]
  %s5 = sld [smem:[#allocation0]]
  $region38: #{_fused_forward.1} parent=0
    _
  %s7 = ssub.s32 1, %s5
  %s8 = scalar_select 0, %s7, %s5
  $region1: #{_fused_forward.1} parent=0
    #allocation2 [shape = 'u8[8192]{0}', space=vmem, size = 0x2000, scoped, tag = 'input window, operand 0, single buffered']
    #allocation3 [shape = 's32[1]{0}', space=sflag, size = 0x4, scoped, tag = 'scoped memory for _fused_forward.1']
    #allocation4 [shape = 's32[1]{0}', space=sflag, size = 0x4, scoped, tag = 'scoped memory for _fused_forward.1']
    #allocation5 [shape = 'u8[8192]{0}', space=vmem, size = 0x2000, scoped, tag = 'input window, operand 1, single buffered']
    #allocation6 [shape = 's32[1]{0}', space=sflag, size = 0x4, scoped, tag = 'scoped memory for _fused_forward.1']
    #allocation7 [shape = 'u8[131072]{0}', space=vmem, size = 0x20000, scoped, tag = 'input window, operand 2, single buffered']
    #allocation8 [shape = 'u8[8192]{0}', space=vmem, size = 0x2000, scoped, tag = 'output window, operand 0, single buffered']
    %9 = vsyncpa [#allocation3], 0
    %10 = vsyncpa [#allocation6], 0
    %11 = vsyncpa [#allocation4], 0
    // Predicated region
    $region2: #{_fused_forward.1} parent=1 // pred_check
      _
    $region3: #{_fused_forward.1} parent=1 // pred_check_branch
      %13 = sbr.rel (0) target = $region5
    $region4: #{_fused_forward.1} parent=1 // pred_region
      %s15 = ssub.s32 256, 256
      %16 = vsyncadd [#allocation3], %s15
      %s17 = sshll.u32 [#allocation2], 4
      %s18 = int_to_ptr.vmem [resolvable:$true] %s17
      %23 = dma.hbm_to_vmem [thread:$0]  %s0, 256, %s18, [#allocation3], 128, 128, 8
    $region5: #{_fused_forward.1} parent=1 // pred_fallthru
      _
    // Predicated region
    $region6: #{_fused_forward.1} parent=1 // pred_check
      _
    $region7: #{_fused_forward.1} parent=1 // pred_check_branch
      %25 = sbr.rel (0) target = $region9
    $region8: #{_fused_forward.1} parent=1 // pred_region
      %s27 = ssub.s32 256, 256
      %28 = vsyncadd [#allocation6], %s27
      %s29 = sshll.u32 [#allocation5], 4
      %s30 = int_to_ptr.vmem [resolvable:$true] %s29
      %35 = dma.hbm_to_vmem [thread:$0]  %s1, 256, %s30, [#allocation6], 128, 128, 8
    $region9: #{_fused_forward.1} parent=1 // pred_fallthru
      _
    // Predicated region
    $region10: #{_fused_forward.1} parent=1 // pred_check
      _
    $region11: #{_fused_forward.1} parent=1 // pred_check_branch
      %37 = sbr.rel (0) target = $region13
    $region12: #{_fused_forward.1} parent=1 // pred_region
      %s39 = ssub.s32 4096, 4096
      %40 = vsyncadd [#allocation6], %s39
      %s41 = sshll.u32 [#allocation7], 4
      %s42 = int_to_ptr.vmem [resolvable:$true] %s41
      %47 = dma.hbm_to_vmem [thread:$0]  %s2, 4096, %s42, [#allocation6], 128, 128, 8
    $region13: #{_fused_forward.1} parent=1 // pred_fallthru
      _
    // Predicated region
    $region14: #{_fused_forward.1} parent=1 // pred_check
      _
    $region15: #{_fused_forward.1} parent=1 // pred_check_branch
      %49 = sbr.rel (0) target = $region17
    $region16: #{_fused_forward.1} parent=1 // pred_region
      _
    $region17: #{_fused_forward.1} parent=1 // pred_fallthru
      _
    // Predicated region
    $region18: #{_fused_forward.1} parent=1 // pred_check
      _
    $region19: #{_fused_forward.1} parent=1 // pred_check_branch
      %51 = sbr.rel (0) target = $region21
    $region20: #{_fused_forward.1} parent=1 // pred_region
      %52 = dma.done [#allocation3], 256
    $region21: #{_fused_forward.1} parent=1 // pred_fallthru
      _
    // Predicated region
    $region22: #{_fused_forward.1} parent=1 // pred_check
      _
    $region23: #{_fused_forward.1} parent=1 // pred_check_branch
      %54 = sbr.rel (0) target = $region25
    $region24: #{_fused_forward.1} parent=1 // pred_region
      %55 = dma.done [#allocation6], 256
    $region25: #{_fused_forward.1} parent=1 // pred_fallthru
      _
    // Predicated region
    $region26: #{_fused_forward.1} parent=1 // pred_check
      _
    $region27: #{_fused_forward.1} parent=1 // pred_check_branch
      %57 = sbr.rel (0) target = $region29
    $region28: #{_fused_forward.1} parent=1 // pred_region
      %58 = dma.done [#allocation6], 4096
    $region29: #{_fused_forward.1} parent=1 // pred_fallthru
      _
    %v59 = vld [vmem:[#allocation2] sm:$0xff]
    %v60 = vld [vmem:[#allocation2 + $0x8] sm:$0xff]
    %v61 = vld [vmem:[%s3] sm:$0x1]
    %v62 = vld [vmem:[%s3 + $0x1] sm:$0x1]
    %v63 = vld [vmem:[%s3 + $0x2] sm:$0x1]
    %v64 = vld [vmem:[#allocation5] sm:$0xff]
    %v65 = vld [vmem:[#allocation5 + $0x8] sm:$0xff]
    %v66 = vlaneseq
    %v67 = vshrl.u32 %v66, 7
    %v68 = vsub.s32 0, %v67
    %v69 = vrot.slane %v61, %v68
    %vm70 = vcmask 130048
    %v72 = vsel %vm70, %v59, 0
    %v75 = vsel %vm70, %v60, 0
    %77 = vmatprep.subr.mxu0 0.0
    %78 = vmatpush1.msra.mxu0 %v64
    %79 = vmatprep.subr.mxu0 0.0
    %80 = vmatpush1.msra.mxu0 %v65
    %81 = vmatprep.subr.mxu0 0.0
    %82 = vmatpush1.msra.mxu0 0.0
    %83 = vmatprep.subr.mxu0 0.0
    %84 = vmatpush1.msra.mxu0 0.0
    %85 = vmatprep.subr.mxu0 0.0
    %86 = vmatpush1.msra.mxu0 0.0
    %87 = vmatprep.subr.mxu0 0.0
    %88 = vmatpush1.msra.mxu0 0.0
    %89 = vmatprep.subr.mxu0 0.0
    %90 = vmatpush1.msra.mxu0 0.0
    %91 = vmatprep.subr.mxu0 0.0
    %92 = vmatpush1.msra.mxu0 0.0
    %93 = vmatprep.subr.mxu0 0.0
    %94 = vmatpush1.msra.mxu0 0.0
    %95 = vmatprep.subr.mxu0 0.0
    %96 = vmatpush1.msra.mxu0 0.0
    %97 = vmatprep.subr.mxu0 0.0
    %98 = vmatpush1.msra.mxu0 0.0
    %99 = vmatprep.subr.mxu0 0.0
    %100 = vmatpush1.msra.mxu0 0.0
    %101 = vmatprep.subr.mxu0 0.0
    %102 = vmatpush1.msra.mxu0 0.0
    %103 = vmatprep.subr.mxu0 0.0
    %104 = vmatpush1.msra.mxu0 0.0
    %105 = vmatprep.subr.mxu0 0.0
    %106 = vmatpush1.msra.mxu0 0.0
    %107 = vmatprep.subr.mxu0 0.0
    %108 = vmatpush1.msra.mxu0 0.0
    %109 = vmatprep.subr.mxu0 0.0
    %110 = vmatpush1.msra.mxu0 0.0
    %111 = vmatprep.subr.mxu0 0.0
    %112 = vmatpush1.msra.mxu0 0.0
    %113 = vmatprep.subr.mxu0 0.0
    %114 = vmatpush1.msra.mxu0 0.0
    %115 = vmatprep.subr.mxu0 0.0
    %116 = vmatpush1.msra.mxu0 0.0
    %117 = vmatprep.subr.mxu0 0.0
    %118 = vmatpush1.msra.mxu0 0.0
    %119 = vmatprep.subr.mxu0 0.0
    %120 = vmatpush1.msra.mxu0 0.0
    %121 = vmatprep.subr.mxu0 0.0
    %122 = vmatpush1.msra.mxu0 0.0
    %123 = vmatprep.subr.mxu0 0.0
    %124 = vmatpush1.msra.mxu0 0.0
    %125 = vmatprep.subr.mxu0 0.0
    %126 = vmatpush1.msra.mxu0 0.0
    %127 = vmatprep.subr.mxu0 0.0
    %128 = vmatpush1.msra.mxu0 0.0
    %129 = vmatprep.subr.mxu0 0.0
    %130 = vmatpush1.msra.mxu0 0.0
    %131 = vmatprep.subr.mxu0 0.0
    %132 = vmatpush1.msra.mxu0 0.0
    %133 = vmatprep.subr.mxu0 0.0
    %134 = vmatpush1.msra.mxu0 0.0
    %135 = vmatprep.subr.mxu0 0.0
    %136 = vmatpush1.msra.mxu0 0.0
    %137 = vmatprep.subr.mxu0 0.0
    %138 = vmatpush1.msra.mxu0 0.0
    %139 = vmatprep.subr.mxu0 0.0
    %140 = vmatpush1.msra.mxu0 0.0
    %141 = vmatprep.mubr.f32.mxu0 0.0
    %142 = vmatmul.mubr.f32.gmra.mrb[0].mxu0 %v72
    %v143 = vpop.f32.mrb[0].mxu0
    %v144 = vadd.f32 %v69, %v143
    %v145 = vpop.f32.mrb[0].mxu0
    %146 = vmatprep.mubr.f32.mxu0 0.0
    %147 = vmatmul.mubr.f32.gmra.mrb[0].mxu0 %v75
    %v148 = vpop.f32.mrb[0].mxu0
    %v149 = vadd.f32 %v69, %v148
    %v150 = vpop.f32.mrb[0].mxu0
    %151 = vdwg.mxu0
    %v152 = vtanh.pop %v144
    %v153 = vtanh.pop %v149
    %v154 = vld [vmem:[#allocation7] sm:$0xff]
    %v155 = vld [vmem:[#allocation7 + $0x8] sm:$0xff]
    %v156 = vld [vmem:[#allocation7 + $0x10] sm:$0xff]
    %v157 = vld [vmem:[#allocation7 + $0x18] sm:$0xff]
    %v158 = vld [vmem:[#allocation7 + $0x20] sm:$0xff]
    %v159 = vld [vmem:[#allocation7 + $0x28] sm:$0xff]
    %v160 = vld [vmem:[#allocation7 + $0x30] sm:$0xff]
    %v161 = vld [vmem:[#allocation7 + $0x38] sm:$0xff]
    %v162 = vld [vmem:[#allocation7 + $0x40] sm:$0xff]
    %v163 = vld [vmem:[#allocation7 + $0x48] sm:$0xff]
    %v164 = vld [vmem:[#allocation7 + $0x50] sm:$0xff]
    %v165 = vld [vmem:[#allocation7 + $0x58] sm:$0xff]
    %v166 = vld [vmem:[#allocation7 + $0x60] sm:$0xff]
    %v167 = vld [vmem:[#allocation7 + $0x68] sm:$0xff]
    %v168 = vld [vmem:[#allocation7 + $0x70] sm:$0xff]
    %v169 = vld [vmem:[#allocation7 + $0x78] sm:$0xff]
    %v170 = vlaneseq
    %v171 = vshrl.u32 %v170, 7
    %v172 = vsub.s32 0, %v171
    %v173 = vrot.slane %v62, %v172
    %174 = vmatprep.subr.mxu0 0.0
    %175 = vmatpush1.msra.mxu0 %v154
    %176 = vmatprep.subr.mxu0 0.0
    %177 = vmatpush1.msra.mxu0 %v155
    %178 = vmatprep.subr.mxu0 0.0
    %179 = vmatpush1.msra.mxu0 %v156
    %180 = vmatprep.subr.mxu0 0.0
    %181 = vmatpush1.msra.mxu0 %v157
    %182 = vmatprep.subr.mxu0 0.0
    %183 = vmatpush1.msra.mxu0 %v158
    %184 = vmatprep.subr.mxu0 0.0
    %185 = vmatpush1.msra.mxu0 %v159
    %186 = vmatprep.subr.mxu0 0.0
    %187 = vmatpush1.msra.mxu0 %v160
    %188 = vmatprep.subr.mxu0 0.0
    %189 = vmatpush1.msra.mxu0 %v161
    %190 = vmatprep.subr.mxu0 0.0
    %191 = vmatpush1.msra.mxu0 %v162
    %192 = vmatprep.subr.mxu0 0.0
    %193 = vmatpush1.msra.mxu0 %v163
    %194 = vmatprep.subr.mxu0 0.0
    %195 = vmatpush1.msra.mxu0 %v164
    %196 = vmatprep.subr.mxu0 0.0
    %197 = vmatpush1.msra.mxu0 %v165
    %198 = vmatprep.subr.mxu0 0.0
    %199 = vmatpush1.msra.mxu0 %v166
    %200 = vmatprep.subr.mxu0 0.0
    %201 = vmatpush1.msra.mxu0 %v167
    %202 = vmatprep.subr.mxu0 0.0
    %203 = vmatpush1.msra.mxu0 %v168
    %204 = vmatprep.subr.mxu0 0.0
    %205 = vmatpush1.msra.mxu0 %v169
    %206 = vmatprep.subr.mxu0 0.0
    %207 = vmatpush1.msra.mxu0 0.0
    %208 = vmatprep.subr.mxu0 0.0
    %209 = vmatpush1.msra.mxu0 0.0
    %210 = vmatprep.subr.mxu0 0.0
    %211 = vmatpush1.msra.mxu0 0.0
    %212 = vmatprep.subr.mxu0 0.0
    %213 = vmatpush1.msra.mxu0 0.0
    %214 = vmatprep.subr.mxu0 0.0
    %215 = vmatpush1.msra.mxu0 0.0
    %216 = vmatprep.subr.mxu0 0.0
    %217 = vmatpush1.msra.mxu0 0.0
    %218 = vmatprep.subr.mxu0 0.0
    %219 = vmatpush1.msra.mxu0 0.0
    %220 = vmatprep.subr.mxu0 0.0
    %221 = vmatpush1.msra.mxu0 0.0
    %222 = vmatprep.subr.mxu0 0.0
    %223 = vmatpush1.msra.mxu0 0.0
    %224 = vmatprep.subr.mxu0 0.0
    %225 = vmatpush1.msra.mxu0 0.0
    %226 = vmatprep.subr.mxu0 0.0
    %227 = vmatpush1.msra.mxu0 0.0
    %228 = vmatprep.subr.mxu0 0.0
    %229 = vmatpush1.msra.mxu0 0.0
    %230 = vmatprep.subr.mxu0 0.0
    %231 = vmatpush1.msra.mxu0 0.0
    %232 = vmatprep.subr.mxu0 0.0
    %233 = vmatpush1.msra.mxu0 0.0
    %234 = vmatprep.subr.mxu0 0.0
    %235 = vmatpush1.msra.mxu0 0.0
    %236 = vmatprep.subr.mxu0 0.0
    %237 = vmatpush1.msra.mxu0 0.0
    %238 = vmatprep.mubr.f32.mxu0 0.0
    %239 = vmatmul.mubr.f32.gmra.mrb[0].mxu0 %v152
    %v240 = vpop.f32.mrb[0].mxu0
    %v241 = vadd.f32 %v173, %v240
    %v242 = vpop.f32.mrb[0].mxu0
    %243 = vmatprep.mubr.f32.mxu0 0.0
    %244 = vmatmul.mubr.f32.gmra.mrb[0].mxu0 %v153
    %v245 = vpop.f32.mrb[0].mxu0
    %v246 = vadd.f32 %v173, %v245
    %v247 = vpop.f32.mrb[0].mxu0
    %248 = vdwg.mxu0
    %v249 = vtanh.pop %v241
    %v250 = vtanh.pop %v246
    %v251 = vld [vmem:[#allocation7 + $0x80] sm:$0xff]
    %v252 = vld [vmem:[#allocation7 + $0x88] sm:$0xff]
    %v253 = vld [vmem:[#allocation7 + $0x90] sm:$0xff]
    %v254 = vld [vmem:[#allocation7 + $0x98] sm:$0xff]
    %v255 = vld [vmem:[#allocation7 + $0xa0] sm:$0xff]
    %v256 = vld [vmem:[#allocation7 + $0xa8] sm:$0xff]
    %v257 = vld [vmem:[#allocation7 + $0xb0] sm:$0xff]
    %v258 = vld [vmem:[#allocation7 + $0xb8] sm:$0xff]
    %v259 = vld [vmem:[#allocation7 + $0xc0] sm:$0xff]
    %v260 = vld [vmem:[#allocation7 + $0xc8] sm:$0xff]
    %v261 = vld [vmem:[#allocation7 + $0xd0] sm:$0xff]
    %v262 = vld [vmem:[#allocation7 + $0xd8] sm:$0xff]
    %v263 = vld [vmem:[#allocation7 + $0xe0] sm:$0xff]
    %v264 = vld [vmem:[#allocation7 + $0xe8] sm:$0xff]
    %v265 = vld [vmem:[#allocation7 + $0xf0] sm:$0xff]
    %v266 = vld [vmem:[#allocation7 + $0xf8] sm:$0xff]
    %v267 = vlaneseq
    %v268 = vshrl.u32 %v267, 7
    %v269 = vsub.s32 0, %v268
    %v270 = vrot.slane %v63, %v269
    %271 = vmatprep.subr.mxu0 0.0
    %272 = vmatpush1.msra.mxu0 %v251
    %273 = vmatprep.subr.mxu0 0.0
    %274 = vmatpush1.msra.mxu0 %v252
    %275 = vmatprep.subr.mxu0 0.0
    %276 = vmatpush1.msra.mxu0 %v253
    %277 = vmatprep.subr.mxu0 0.0
    %278 = vmatpush1.msra.mxu0 %v254
    %279 = vmatprep.subr.mxu0 0.0
    %280 = vmatpush1.msra.mxu0 %v255
    %281 = vmatprep.subr.mxu0 0.0
    %282 = vmatpush1.msra.mxu0 %v256
    %283 = vmatprep.subr.mxu0 0.0
    %284 = vmatpush1.msra.mxu0 %v257
    %285 = vmatprep.subr.mxu0 0.0
    %286 = vmatpush1.msra.mxu0 %v258
    %287 = vmatprep.subr.mxu0 0.0
    %288 = vmatpush1.msra.mxu0 %v259
    %289 = vmatprep.subr.mxu0 0.0
    %290 = vmatpush1.msra.mxu0 %v260
    %291 = vmatprep.subr.mxu0 0.0
    %292 = vmatpush1.msra.mxu0 %v261
    %293 = vmatprep.subr.mxu0 0.0
    %294 = vmatpush1.msra.mxu0 %v262
    %295 = vmatprep.subr.mxu0 0.0
    %296 = vmatpush1.msra.mxu0 %v263
    %297 = vmatprep.subr.mxu0 0.0
    %298 = vmatpush1.msra.mxu0 %v264
    %299 = vmatprep.subr.mxu0 0.0
    %300 = vmatpush1.msra.mxu0 %v265
    %301 = vmatprep.subr.mxu0 0.0
    %302 = vmatpush1.msra.mxu0 %v266
    %303 = vmatprep.subr.mxu0 0.0
    %304 = vmatpush1.msra.mxu0 0.0
    %305 = vmatprep.subr.mxu0 0.0
    %306 = vmatpush1.msra.mxu0 0.0
    %307 = vmatprep.subr.mxu0 0.0
    %308 = vmatpush1.msra.mxu0 0.0
    %309 = vmatprep.subr.mxu0 0.0
    %310 = vmatpush1.msra.mxu0 0.0
    %311 = vmatprep.subr.mxu0 0.0
    %312 = vmatpush1.msra.mxu0 0.0
    %313 = vmatprep.subr.mxu0 0.0
    %314 = vmatpush1.msra.mxu0 0.0
    %315 = vmatprep.subr.mxu0 0.0
    %316 = vmatpush1.msra.mxu0 0.0
    %317 = vmatprep.subr.mxu0 0.0
    %318 = vmatpush1.msra.mxu0 0.0
    %319 = vmatprep.subr.mxu0 0.0
    %320 = vmatpush1.msra.mxu0 0.0
    %321 = vmatprep.subr.mxu0 0.0
    %322 = vmatpush1.msra.mxu0 0.0
    %323 = vmatprep.subr.mxu0 0.0
    %324 = vmatpush1.msra.mxu0 0.0
    %325 = vmatprep.subr.mxu0 0.0
    %326 = vmatpush1.msra.mxu0 0.0
    %327 = vmatprep.subr.mxu0 0.0
    %328 = vmatpush1.msra.mxu0 0.0
    %329 = vmatprep.subr.mxu0 0.0
    %330 = vmatpush1.msra.mxu0 0.0
    %331 = vmatprep.subr.mxu0 0.0
    %332 = vmatpush1.msra.mxu0 0.0
    %333 = vmatprep.subr.mxu0 0.0
    %334 = vmatpush1.msra.mxu0 0.0
    %335 = vmatprep.mubr.f32.mxu0 0.0
    %336 = vmatmul.mubr.f32.gmra.mrb[0].mxu0 %v249
    %v337 = vpop.f32.mrb[0].mxu0
    %v338 = vadd.f32 %v270, %v337
    %v339 = vpop.f32.mrb[0].mxu0
    %340 = vmatprep.mubr.f32.mxu0 0.0
    %341 = vmatmul.mubr.f32.gmra.mrb[0].mxu0 %v250
    %v342 = vpop.f32.mrb[0].mxu0
    %v343 = vadd.f32 %v270, %v342
    %v344 = vpop.f32.mrb[0].mxu0
    %345 = vdwg.mxu0
    %v346 = vlaneseq
    %v347 = vand.u32 %v346, 127
    %vm348 = vcmp.lt.s32.totalorder %v347, 4
    %v349 = vsel %vm348, 1, 0
    %vm350 = vcmp.eq.s32.totalorder %v349, 1
    %v351 = vsel %vm350, %v338, -1e+30
    %v352 = vsel %vm350, %v343, -1e+30
    %353 = vmax.xlane.f32.xlu0 %v351
    %v354 = vpop.xlane.xlu0 %353
    %355 = vmax.xlane.f32.xlu0 %v352
    %v356 = vpop.xlane.xlu0 %355
    %v357 = vsub.f32 %v351, %v354
    %v358 = vsub.f32 %v352, %v356
    %v359 = vmul.f32 %v357, 1.442695
    %v360 = vpow.pop %v359
    %v361 = vmul.f32 %v358, 1.442695
    %v362 = vpow.pop %v361
    %363 = vadd.xlane.f32.xlu0 %v360
    %v364 = vpop.xlane.xlu0 %363
    %365 = vadd.xlane.f32.xlu0 %v362
    %v366 = vpop.xlane.xlu0 %365
    %v367 = vlog2.pop %v364
    %v368 = vmul.f32 %v367, 0.6931472
    %v369 = vlog2.pop %v366
    %v370 = vmul.f32 %v369, 0.6931472
    %v371 = vadd.f32 %v354, %v368
    %v372 = vadd.f32 %v356, %v370
    %v373 = vsub.f32 %v351, %v371
    %v374 = vsub.f32 %v352, %v372
    %v375 = vsel %vm350, %v373, %v338
    %v376 = vsel %vm350, %v374, %v343
    %377 = vst [vmem:[#allocation8] sm:$0xff] %v375
    %378 = vst [vmem:[#allocation8 + $0x8] sm:$0xff] %v376
    // Predicated region
    $region30: #{_fused_forward.1} parent=1 // pred_check
      _
    $region31: #{_fused_forward.1} parent=1 // pred_check_branch
      %380 = sbr.rel (0) target = $region33
    $region32: #{_fused_forward.1} parent=1 // pred_region
      %s382 = ssub.s32 256, 256
      %383 = vsyncadd [#allocation4], %s382
      %s384 = sshll.u32 [#allocation8], 4
      %s385 = int_to_ptr.vmem [resolvable:$true] %s384
      %390 = dma.vmem_to_hbm [thread:$0]  %s385, 256, %s4, [#allocation4], 128, 128, 8
    $region33: #{_fused_forward.1} parent=1 // pred_fallthru
      _
    // Predicated region
    $region34: #{_fused_forward.1} parent=1 // pred_check
      _
    $region35: #{_fused_forward.1} parent=1 // pred_check_branch
      %392 = sbr.rel (0) target = $region37
    $region36: #{_fused_forward.1} parent=1 // pred_region
      %393 = dma.done [#allocation4], 256
    $region37: #{_fused_forward.1} parent=1 // pred_fallthru
      _
    %394 = vsyncpa [#allocation3], 1
    %395 = vsyncpa [#allocation6], 1
    %396 = vsyncpa [#allocation4], 1

</llo_original>
